<compile_context>
chip_gen: v6e
topology: v6e:2x2x1
jax: 0.10.0
libtpu: 0.0.40
codegen_flags: <defaults>
</compile_context>

<pallas_src>
import jax
import jax.numpy as jnp
from jax.experimental import pallas as pl
from jax.experimental.pallas import tpu as pltpu

_LANES = 128
_SUBLANES = 8
_GRAIN = _SUBLANES * _LANES            # 1024 elements: one full (8,128) tile
_MAX_TILE_COLS = 8192                  # 8*8192*4B = 256 KiB per buffer per block


def _round_up(x, m):
    return ((x + m - 1) // m) * m


def _reparam_kernel(mean_ref, logvar_ref, eps_ref, out_ref):
    std = jnp.exp(0.5 * logvar_ref[...])
    out_ref[...] = (mean_ref[...] + std * eps_ref[...]).astype(out_ref.dtype)


def mean_field_gaussian_bn_weights_forward(mean, logvar, *, sample=True, key=None,
                                           use_kernel=None,
                                           max_tile_cols=_MAX_TILE_COLS):
    """JAX/Pallas equivalent of MeanFieldGaussianBatchNormWeights.forward.

    mean, logvar: f32[num_features]
    key:          jax PRNG key (required when sample=True).
    use_kernel:   None -> auto (fast jnp path for small N), True/False to force.
    Returns:      f32[num_features]
    """
    if not sample:
        return mean
    if key is None:
        raise ValueError("key must be provided when sample=True")

    num_features = mean.shape[0]
    # eps drawn on the flat, un-padded shape: independent of tiling/layout.
    eps = jax.random.normal(key, (num_features,), dtype=jnp.float32)

    if use_kernel is None:
        # For small feature counts the pallas_call fixed cost + layout plumbing
        # dwarfs the useful work; let XLA fuse it into one elementwise kernel.
        use_kernel = num_features >= 4 * _GRAIN
    if not use_kernel:
        return (mean.astype(jnp.float32)
                + jnp.exp(0.5 * logvar.astype(jnp.float32)) * eps).astype(mean.dtype)

    # Lane-dense slab: (8, cols) with cols a multiple of 128.
    padded = _round_up(num_features, _GRAIN)
    cols = padded // _SUBLANES

    def _to_slab(x):
        x = x.astype(jnp.float32)
        if padded != num_features:
            x = jnp.pad(x, (0, padded - num_features))
        return x.reshape(_SUBLANES, cols)

    mean2 = _to_slab(mean)
    logvar2 = _to_slab(logvar)
    eps2 = _to_slab(eps)

    tile_cols = min(cols, max(_LANES, _round_up(max_tile_cols, _LANES)))
    grid = (pl.cdiv(cols, tile_cols),)
    spec = pl.BlockSpec((_SUBLANES, tile_cols), lambda i: (0, i))

    cost = pl.CostEstimate(
        flops=3 * padded,               # mul + mul + add per element
        transcendentals=padded,         # one exp per element
        bytes_accessed=16 * padded,     # 3 f32 inputs + 1 f32 output
    )

    z2 = pl.pallas_call(
        _reparam_kernel,
        out_shape=jax.ShapeDtypeStruct((_SUBLANES, cols), jnp.float32),
        grid=grid,
        in_specs=[spec, spec, spec],
        out_specs=spec,
        compiler_params=pltpu.CompilerParams(
            dimension_semantics=("parallel",)),
        cost_estimate=cost,
    )(mean2, logvar2, eps2)

    z = z2.reshape(padded)
    if padded != num_features:
        z = z[:num_features]
    return z.astype(mean.dtype)


if __name__ == "__main__":
    lambda_logvar = -5.0

    root = jax.random.PRNGKey(0)
    k_init, k_s1, k_s2, k_big = jax.random.split(root, 4)

    # --- Typical BatchNorm size: exercise padding + forced kernel path. ---
    num_features = 400
    mean = 0.1 * jax.random.normal(k_init, (num_features,), dtype=jnp.float32)
    logvar = jnp.full((num_features,), lambda_logvar, dtype=jnp.float32)

    # sample=False: returns mean exactly, no kernel.
    z_det = mean_field_gaussian_bn_weights_forward(mean, logvar, sample=False)
    assert jnp.array_equal(z_det, mean)

    # sample=True, kernel forced.
    z1 = jax.block_until_ready(
        mean_field_gaussian_bn_weights_forward(mean, logvar, sample=True,
                                               key=k_s1, use_kernel=True))
    assert z1.shape == (num_features,) and z1.dtype == jnp.float32
    assert bool(jnp.all(jnp.isfinite(z1)))

    # Exact reference: same eps is reproducible from the key outside the kernel.
    eps_ref = jax.random.normal(k_s1, (num_features,), dtype=jnp.float32)
    ref = mean + jnp.exp(0.5 * logvar) * eps_ref
    assert jnp.allclose(z1, ref, atol=1e-6, rtol=1e-6)

    # Same key, different logvar -> same implied eps (reparameterization holds).
    logvar_b = logvar - 2.0
    z2 = jax.block_until_ready(
        mean_field_gaussian_bn_weights_forward(mean, logvar_b, sample=True,
                                               key=k_s1, use_kernel=True))
    eps1 = (z1 - mean) / jnp.exp(0.5 * logvar)
    eps2 = (z2 - mean) / jnp.exp(0.5 * logvar_b)
    assert jnp.allclose(eps1, eps2, atol=1e-4, rtol=1e-4)

    # Different key -> different noise.
    z3 = jax.block_until_ready(
        mean_field_gaussian_bn_weights_forward(mean, logvar, sample=True,
                                               key=k_s2, use_kernel=True))
    assert not jnp.allclose(z1, z3)

    # Auto path (small N): fast jnp route, same result for same key.
    z_auto = jax.block_until_ready(
        mean_field_gaussian_bn_weights_forward(mean, logvar, sample=True, key=k_s1))
    assert jnp.allclose(z_auto, z1, atol=1e-6, rtol=1e-6)

    # --- Multi-block grid (ragged last block) still small enough to be quick. ---
    nf_big = 2500  # pads to 3072 -> cols=384; tile_cols=256 -> grid=2 (ragged tail)
    mean_b = 0.1 * jax.random.normal(k_big, (nf_big,), dtype=jnp.float32)
    logvar_big = jnp.full((nf_big,), lambda_logvar, dtype=jnp.float32)
    z_big = jax.block_until_ready(
        mean_field_gaussian_bn_weights_forward(mean_b, logvar_big, sample=True,
                                               key=k_s2, use_kernel=True,
                                               max_tile_cols=256))
    eps_big = jax.random.normal(k_s2, (nf_big,), dtype=jnp.float32)
    ref_big = mean_b + jnp.exp(0.5 * logvar_big) * eps_big
    assert jnp.allclose(z_big, ref_big, atol=1e-6, rtol=1e-6)

    print("KERNEL_OK")
</pallas_src>

<mosaic_0001>
module attributes {stable_mosaic.version = 11 : i64} {
  func.func @_reparam_kernel(%arg0: i32, %arg1: memref<8x128xf32, #tpu.memory_space<vmem>>, %arg2: memref<8x128xf32, #tpu.memory_space<vmem>>, %arg3: memref<8x128xf32, #tpu.memory_space<vmem>>, %arg4: memref<8x128xf32, #tpu.memory_space<vmem>>) attributes {dimension_semantics = [#tpu.dimension_semantics<parallel>], iteration_bounds = array<i64: 1>, scalar_prefetch = 0 : i64, scratch_operands = 0 : i64, tpu.core_type = #tpu.core_type<tc>, window_params = [{transform_indices = @transform_0, window_bounds = array<i64: 8, 128>}, {transform_indices = @transform_1, window_bounds = array<i64: 8, 128>}, {transform_indices = @transform_2, window_bounds = array<i64: 8, 128>}, {transform_indices = @transform_3, window_bounds = array<i64: 8, 128>}]} {
    %c0 = arith.constant 0 : index
    %c0_0 = arith.constant 0 : index
    %0 = vector.load %arg2[%c0, %c0_0] : memref<8x128xf32, #tpu.memory_space<vmem>>, vector<8x128xf32>
    %cst = arith.constant 5.000000e-01 : f32
    %1 = vector.broadcast %cst : f32 to vector<8x128xf32>
    %2 = arith.mulf %1, %0 : vector<8x128xf32>
    %3 = math.exp %2 : vector<8x128xf32>
    %c0_1 = arith.constant 0 : index
    %c0_2 = arith.constant 0 : index
    %4 = vector.load %arg1[%c0_1, %c0_2] : memref<8x128xf32, #tpu.memory_space<vmem>>, vector<8x128xf32>
    %c0_3 = arith.constant 0 : index
    %c0_4 = arith.constant 0 : index
    %5 = vector.load %arg3[%c0_3, %c0_4] : memref<8x128xf32, #tpu.memory_space<vmem>>, vector<8x128xf32>
    %6 = arith.mulf %3, %5 : vector<8x128xf32>
    %7 = arith.addf %4, %6 : vector<8x128xf32>
    %c0_5 = arith.constant 0 : index
    %c0_6 = arith.constant 0 : index
    %8 = vector.load %arg4[%c0_5, %c0_6] : memref<8x128xf32, #tpu.memory_space<vmem>>, vector<8x128xf32>
    tpu.vector_store %arg4[%c0_5, %c0_6], %7 {strides = array<i32>} : memref<8x128xf32, #tpu.memory_space<vmem>>, vector<8x128xf32>,
    return
  }
  func.func @transform_0(%arg0: i32) -> (i32, i32) {
    %c0_i32 = arith.constant 0 : i32
    %c0_i32_0 = arith.constant 0 : i32
    return %c0_i32, %arg0 : i32, i32
  }
  func.func @transform_1(%arg0: i32) -> (i32, i32) {
    %c0_i32 = arith.constant 0 : i32
    %c0_i32_0 = arith.constant 0 : i32
    return %c0_i32, %arg0 : i32, i32
  }
  func.func @transform_2(%arg0: i32) -> (i32, i32) {
    %c0_i32 = arith.constant 0 : i32
    %c0_i32_0 = arith.constant 0 : i32
    return %c0_i32, %arg0 : i32, i32
  }
  func.func @transform_3(%arg0: i32) -> (i32, i32) {
    %c0_i32 = arith.constant 0 : i32
    %c0_i32_0 = arith.constant 0 : i32
    return %c0_i32, %arg0 : i32, i32
  }
}

</mosaic_0001>

<llo_original>
// kernel: tpu_custom_call.1
$region0: #{tpu_custom_call.1}
  #allocation0 [shape = 'u32[]', space=smem, size = 0x4, offset = 0x4, fixed_abs, tag = 'smem constant byte address 0x4 - core index']
  #allocation1 [shape = 'u32[144,128]{1,0:T(1,128)}', space=vmem, size = 0x12000, scoped, tag = 'internal scratch']
  %s0 = inlined_call_operand.hbm [shape: f32[8,128], index: 0, kind: input, shape index: {}]
  %s1 = inlined_call_operand.hbm [shape: f32[8,128], index: 1, kind: input, shape index: {}]
  %s2 = inlined_call_operand.hbm [shape: f32[8,128], index: 2, kind: input, shape index: {}]
  %s3 = inlined_call_operand.hbm [shape: f32[8,128], index: 3, kind: output, shape index: {}]
  %s4 = sld [smem:[#allocation0]]
  $region34: #{tpu_custom_call.1} parent=0
    _
  %s6 = ssub.s32 1, %s4
  %s7 = scalar_select 0, %s6, %s4
  $region1: #{tpu_custom_call.1} parent=0
    #allocation2 [shape = 'u8[4096]{0}', space=vmem, size = 0x1000, scoped, tag = 'input window, operand 0, single buffered']
    #allocation3 [shape = 's32[1]{0}', space=sflag, size = 0x4, scoped, tag = 'scoped memory for tpu_custom_call.1']
    #allocation4 [shape = 's32[1]{0}', space=sflag, size = 0x4, scoped, tag = 'scoped memory for tpu_custom_call.1']
    #allocation5 [shape = 'u8[4096]{0}', space=vmem, size = 0x1000, scoped, tag = 'input window, operand 1, single buffered']
    #allocation6 [shape = 's32[1]{0}', space=sflag, size = 0x4, scoped, tag = 'scoped memory for tpu_custom_call.1']
    #allocation7 [shape = 'u8[4096]{0}', space=vmem, size = 0x1000, scoped, tag = 'input window, operand 2, single buffered']
    #allocation8 [shape = 'u8[4096]{0}', space=vmem, size = 0x1000, scoped, tag = 'output window, operand 0, single buffered']
    %8 = vsyncpa [#allocation3], 0
    %9 = vsyncpa [#allocation6], 0
    %10 = vsyncpa [#allocation4], 0
    // Predicated region
    $region2: #{tpu_custom_call.1} parent=1 // pred_check
      _
    $region3: #{tpu_custom_call.1} parent=1 // pred_check_branch
      %12 = sbr.rel (0) target = $region5
    $region4: #{tpu_custom_call.1} parent=1 // pred_region
      %s14 = ssub.s32 128, 128
      %15 = vsyncadd [#allocation3], %s14
      %s17 = sshll.u32 [#allocation2], 4
      %s18 = int_to_ptr.vmem [resolvable:$true] %s17
      %20 = dma.hbm_to_vmem [thread:$0]  %s0, 128, %s18, [#allocation3]
    $region5: #{tpu_custom_call.1} parent=1 // pred_fallthru
      _
    // Predicated region
    $region6: #{tpu_custom_call.1} parent=1 // pred_check
      _
    $region7: #{tpu_custom_call.1} parent=1 // pred_check_branch
      %22 = sbr.rel (0) target = $region9
    $region8: #{tpu_custom_call.1} parent=1 // pred_region
      %s24 = ssub.s32 128, 128
      %25 = vsyncadd [#allocation6], %s24
      %s27 = sshll.u32 [#allocation5], 4
      %s28 = int_to_ptr.vmem [resolvable:$true] %s27
      %30 = dma.hbm_to_vmem [thread:$0]  %s1, 128, %s28, [#allocation6]
    $region9: #{tpu_custom_call.1} parent=1 // pred_fallthru
      _
    // Predicated region
    $region10: #{tpu_custom_call.1} parent=1 // pred_check
      _
    $region11: #{tpu_custom_call.1} parent=1 // pred_check_branch
      %32 = sbr.rel (0) target = $region13
    $region12: #{tpu_custom_call.1} parent=1 // pred_region
      %s34 = ssub.s32 128, 128
      %35 = vsyncadd [#allocation6], %s34
      %s37 = sshll.u32 [#allocation7], 4
      %s38 = int_to_ptr.vmem [resolvable:$true] %s37
      %40 = dma.hbm_to_vmem [thread:$0]  %s2, 128, %s38, [#allocation6]
    $region13: #{tpu_custom_call.1} parent=1 // pred_fallthru
      _
    // Predicated region
    $region14: #{tpu_custom_call.1} parent=1 // pred_check
      _
    $region15: #{tpu_custom_call.1} parent=1 // pred_check_branch
      %42 = sbr.rel (0) target = $region17
    $region16: #{tpu_custom_call.1} parent=1 // pred_region
      %43 = dma.done [#allocation3], 128
    $region17: #{tpu_custom_call.1} parent=1 // pred_fallthru
      _
    // Predicated region
    $region18: #{tpu_custom_call.1} parent=1 // pred_check
      _
    $region19: #{tpu_custom_call.1} parent=1 // pred_check_branch
      %45 = sbr.rel (0) target = $region21
    $region20: #{tpu_custom_call.1} parent=1 // pred_region
      %46 = dma.done [#allocation6], 128
    $region21: #{tpu_custom_call.1} parent=1 // pred_fallthru
      _
    // Predicated region
    $region22: #{tpu_custom_call.1} parent=1 // pred_check
      _
    $region23: #{tpu_custom_call.1} parent=1 // pred_check_branch
      %48 = sbr.rel (0) target = $region25
    $region24: #{tpu_custom_call.1} parent=1 // pred_region
      %49 = dma.done [#allocation6], 128
    $region25: #{tpu_custom_call.1} parent=1 // pred_fallthru
      _
    %v50 = vld [vmem:[#allocation5] sm:$0xff]
    %v51 = vmul.f32 %v50, 0.5
    %v52 = vmul.f32 %v51, 1.442695
    %v53 = vpow.pop %v52
    %v54 = vld [vmem:[#allocation2] sm:$0xff]
    %v55 = vld [vmem:[#allocation7] sm:$0xff]
    %v56 = vmul.f32 %v53, %v55
    %v57 = vadd.f32 %v54, %v56
    %58 = vst [vmem:[#allocation8] sm:$0xff] %v57
    // Predicated region
    $region26: #{tpu_custom_call.1} parent=1 // pred_check
      _
    $region27: #{tpu_custom_call.1} parent=1 // pred_check_branch
      %60 = sbr.rel (0) target = $region29
    $region28: #{tpu_custom_call.1} parent=1 // pred_region
      %s62 = ssub.s32 128, 128
      %63 = vsyncadd [#allocation4], %s62
      %s65 = sshll.u32 [#allocation8], 4
      %s66 = int_to_ptr.vmem [resolvable:$true] %s65
      %68 = dma.vmem_to_hbm [thread:$0]  %s66, 128, %s3, [#allocation4]
    $region29: #{tpu_custom_call.1} parent=1 // pred_fallthru
      _
    // Predicated region
    $region30: #{tpu_custom_call.1} parent=1 // pred_check
      _
    $region31: #{tpu_custom_call.1} parent=1 // pred_check_branch
      %70 = sbr.rel (0) target = $region33
    $region32: #{tpu_custom_call.1} parent=1 // pred_region
      %71 = dma.done [#allocation4], 128
    $region33: #{tpu_custom_call.1} parent=1 // pred_fallthru
      _
    %72 = vsyncpa [#allocation3], 1
    %73 = vsyncpa [#allocation6], 1
    %74 = vsyncpa [#allocation4], 1

</llo_original>
